<compile_context>
chip_gen: v5e
topology: v5e:2x2
jax: 0.10.0
libtpu: 0.0.40
codegen_flags: <defaults>
</compile_context>

<pallas_src>
import jax
import jax.numpy as jnp
from jax.experimental import pallas as pl
from jax.experimental.pallas import tpu as pltpu


# ---------------------------------------------------------------------------
# Pallas kernel: complex channel mixing with the mode axis on lanes.
#   out[b, o, m] = sum_i u[b, i, m] * w[i, o, m]   (complex, Gauss 3-mult)
# Shapes per block:
#   ur/ui: (B, Cin, Mb)   wr/wi: (Cin, Cout, Mb)   out: (B, Cout, Mb)
# ---------------------------------------------------------------------------
def _ffno_mode_mix_kernel(ur_ref, ui_ref, wr_ref, wi_ref, or_ref, oi_ref):
    B, Cin, Mb = ur_ref.shape
    Cout = wr_ref.shape[1]

    ur = ur_ref[...]
    ui = ui_ref[...]
    wr = wr_ref[...]
    wi = wi_ref[...]

    acc_r = jnp.zeros((B, Cout, Mb), jnp.float32)
    acc_i = jnp.zeros((B, Cout, Mb), jnp.float32)

    # Unrolled VPU contraction over Cin (small). Gauss's trick:
    #   (a+bi)(c+di): k1 = c(a+b); real = k1 - b(c+d); imag = k1 + a(d-c)
    for i in range(Cin):
        a = ur[:, i:i + 1, :]          # (B, 1, Mb)
        b = ui[:, i:i + 1, :]          # (B, 1, Mb)
        c = wr[i:i + 1, :, :]          # (1, Cout, Mb)
        d = wi[i:i + 1, :, :]          # (1, Cout, Mb)

        k1 = c * (a + b)               # (B, Cout, Mb)
        acc_r = acc_r + (k1 - b * (c + d))
        acc_i = acc_i + (k1 + a * (d - c))

    or_ref[...] = acc_r
    oi_ref[...] = acc_i


def compl_mul2d_pallas(u_modes, weights):
    """einsum('bixy,ioxy->boxy') for complex inputs, via one Pallas call.

    u_modes: complex64 (B, Cin, mx, my)
    weights: complex64 (Cin, Cout, mx, my)
    returns: complex64 (B, Cout, mx, my)
    """
    B, Cin, mx, my = u_modes.shape
    Cout = weights.shape[1]
    M = mx * my

    MBLK = 128
    Mp = ((M + MBLK - 1) // MBLK) * MBLK

    # Mode axis last (lanes) — just reshapes, no transposes.
    ur = jnp.real(u_modes).reshape(B, Cin, M).astype(jnp.float32)
    ui = jnp.imag(u_modes).reshape(B, Cin, M).astype(jnp.float32)
    wr = jnp.real(weights).reshape(Cin, Cout, M).astype(jnp.float32)
    wi = jnp.imag(weights).reshape(Cin, Cout, M).astype(jnp.float32)

    if Mp != M:
        pad = ((0, 0), (0, 0), (0, Mp - M))
        ur = jnp.pad(ur, pad)
        ui = jnp.pad(ui, pad)
        wr = jnp.pad(wr, pad)
        wi = jnp.pad(wi, pad)

    u_spec = pl.BlockSpec((B, Cin, MBLK), lambda m: (0, 0, m))
    w_spec = pl.BlockSpec((Cin, Cout, MBLK), lambda m: (0, 0, m))
    o_spec = pl.BlockSpec((B, Cout, MBLK), lambda m: (0, 0, m))

    out_r, out_i = pl.pallas_call(
        _ffno_mode_mix_kernel,
        out_shape=(
            jax.ShapeDtypeStruct((B, Cout, Mp), jnp.float32),
            jax.ShapeDtypeStruct((B, Cout, Mp), jnp.float32),
        ),
        grid=(Mp // MBLK,),
        in_specs=[u_spec, u_spec, w_spec, w_spec],
        out_specs=(o_spec, o_spec),
        compiler_params=pltpu.CompilerParams(
            dimension_semantics=("parallel",)
        ),
    )(ur, ui, wr, wi)

    out = (out_r[:, :, :M] + 1j * out_i[:, :, :M]).astype(jnp.complex64)
    return out.reshape(B, Cout, mx, my)


# ---------------------------------------------------------------------------
# SpectralConv2d_FFNO forward (x_in=None, x_out=None, transform=True path)
# ---------------------------------------------------------------------------
def spectral_conv2d_ffno(u, weights1, weights2, modes1, modes2):
    """u: float32 (B, Cin, H, W) NCHW. Returns float32 (B, Cout, H, W)."""
    B, Cin, H, W = u.shape
    Cout = weights1.shape[1]

    u_ft = jnp.fft.rfft2(u).astype(jnp.complex64)      # (B, Cin, H, W//2+1)

    # Merge the top-modes and bottom-modes slabs -> single kernel invocation.
    u_modes = jnp.concatenate(
        [u_ft[:, :, :modes1, :modes2], u_ft[:, :, H - modes1:, :modes2]],
        axis=2)                                         # (B, Cin, 2*m1, m2)
    w_all = jnp.concatenate([weights1, weights2], axis=2)   # (Cin, Cout, 2*m1, m2)

    factors = compl_mul2d_pallas(u_modes, w_all)        # (B, Cout, 2*m1, m2)

    out_ft = jnp.zeros((B, Cout, H, W // 2 + 1), dtype=jnp.complex64)
    out_ft = out_ft.at[:, :, :modes1, :modes2].set(factors[:, :, :modes1, :])
    out_ft = out_ft.at[:, :, H - modes1:, :modes2].set(factors[:, :, modes1:, :])

    return jnp.fft.irfft2(out_ft, s=(H, W)).astype(jnp.float32)


# ---------------------------------------------------------------------------
# Pure-JAX reference (mirrors the PyTorch module exactly)
# ---------------------------------------------------------------------------
def spectral_conv2d_ffno_ref(u, weights1, weights2, modes1, modes2):
    B, Cin, H, W = u.shape
    Cout = weights1.shape[1]
    u_ft = jnp.fft.rfft2(u).astype(jnp.complex64)
    f1 = jnp.einsum('bixy,ioxy->boxy', u_ft[:, :, :modes1, :modes2], weights1)
    f2 = jnp.einsum('bixy,ioxy->boxy', u_ft[:, :, -modes1:, :modes2], weights2)
    out_ft = jnp.zeros((B, Cout, H, W // 2 + 1), dtype=jnp.complex64)
    out_ft = out_ft.at[:, :, :modes1, :modes2].set(f1)
    out_ft = out_ft.at[:, :, H - modes1:, :modes2].set(f2)
    return jnp.fft.irfft2(out_ft, s=(H, W)).astype(jnp.float32)


if __name__ == "__main__":
    # Small shapes consistent with the module: batch=2, in/out channels=4,
    # spatial 16x16, modes1=modes2=4.
    B, Cin, Cout, H, W = 2, 4, 4, 16, 16
    modes1, modes2 = 4, 4
    scale = 1.0 / (Cin * Cout)

    key = jax.random.PRNGKey(0)
    k_u, k_w1r, k_w1i, k_w2r, k_w2i = jax.random.split(key, 5)

    u = jax.random.normal(k_u, (B, Cin, H, W), dtype=jnp.float32)

    # torch.rand(..., dtype=torch.cfloat) draws real and imag uniformly in [0, 1)
    w1 = scale * (jax.random.uniform(k_w1r, (Cin, Cout, modes1, modes2), dtype=jnp.float32)
                  + 1j * jax.random.uniform(k_w1i, (Cin, Cout, modes1, modes2), dtype=jnp.float32))
    w2 = scale * (jax.random.uniform(k_w2r, (Cin, Cout, modes1, modes2), dtype=jnp.float32)
                  + 1j * jax.random.uniform(k_w2i, (Cin, Cout, modes1, modes2), dtype=jnp.float32))
    w1 = w1.astype(jnp.complex64)
    w2 = w2.astype(jnp.complex64)

    out = jax.jit(
        lambda u, w1, w2: spectral_conv2d_ffno(u, w1, w2, modes1, modes2)
    )(u, w1, w2)
    out = jax.block_until_ready(out)

    ref = spectral_conv2d_ffno_ref(u, w1, w2, modes1, modes2)
    assert out.shape == (B, Cout, H, W)
    assert jnp.allclose(out, ref, atol=1e-4, rtol=1e-4)

    print("KERNEL_OK")
</pallas_src>

<mosaic_0001>
module attributes {stable_mosaic.version = 11 : i64} {
  func.func @_ffno_mode_mix_kernel(%arg0: i32, %arg1: memref<2x4x128xf32, #tpu.memory_space<vmem>>, %arg2: memref<2x4x128xf32, #tpu.memory_space<vmem>>, %arg3: memref<4x4x128xf32, #tpu.memory_space<vmem>>, %arg4: memref<4x4x128xf32, #tpu.memory_space<vmem>>, %arg5: memref<2x4x128xf32, #tpu.memory_space<vmem>>, %arg6: memref<2x4x128xf32, #tpu.memory_space<vmem>>) attributes {dimension_semantics = [#tpu.dimension_semantics<parallel>], iteration_bounds = array<i64: 1>, scalar_prefetch = 0 : i64, scratch_operands = 0 : i64, tpu.core_type = #tpu.core_type<tc>, window_params = [{transform_indices = @transform_0, window_bounds = array<i64: 2, 4, 128>}, {transform_indices = @transform_1, window_bounds = array<i64: 2, 4, 128>}, {transform_indices = @transform_2, window_bounds = array<i64: 4, 4, 128>}, {transform_indices = @transform_3, window_bounds = array<i64: 4, 4, 128>}, {transform_indices = @transform_4, window_bounds = array<i64: 2, 4, 128>}, {transform_indices = @transform_5, window_bounds = array<i64: 2, 4, 128>}]} {
    %c0 = arith.constant 0 : index
    %c0_0 = arith.constant 0 : index
    %c0_1 = arith.constant 0 : index
    %0 = vector.load %arg1[%c0, %c0_0, %c0_1] : memref<2x4x128xf32, #tpu.memory_space<vmem>>, vector<2x4x128xf32>
    %c0_2 = arith.constant 0 : index
    %c0_3 = arith.constant 0 : index
    %c0_4 = arith.constant 0 : index
    %1 = vector.load %arg2[%c0_2, %c0_3, %c0_4] : memref<2x4x128xf32, #tpu.memory_space<vmem>>, vector<2x4x128xf32>
    %c0_5 = arith.constant 0 : index
    %c0_6 = arith.constant 0 : index
    %c0_7 = arith.constant 0 : index
    %2 = vector.load %arg3[%c0_5, %c0_6, %c0_7] : memref<4x4x128xf32, #tpu.memory_space<vmem>>, vector<4x4x128xf32>
    %c0_8 = arith.constant 0 : index
    %c0_9 = arith.constant 0 : index
    %c0_10 = arith.constant 0 : index
    %3 = vector.load %arg4[%c0_8, %c0_9, %c0_10] : memref<4x4x128xf32, #tpu.memory_space<vmem>>, vector<4x4x128xf32>
    %cst = arith.constant 0.000000e+00 : f32
    %4 = vector.broadcast %cst : f32 to vector<2x4x128xf32>
    %cst_11 = arith.constant 0.000000e+00 : f32
    %5 = vector.broadcast %cst_11 : f32 to vector<2x4x128xf32>
    %6 = vector.extract_strided_slice %0 {offsets = [0, 0, 0], sizes = [2, 1, 128], strides = [1, 1, 1]} : vector<2x4x128xf32> to vector<2x1x128xf32>
    %7 = vector.extract_strided_slice %1 {offsets = [0, 0, 0], sizes = [2, 1, 128], strides = [1, 1, 1]} : vector<2x4x128xf32> to vector<2x1x128xf32>
    %8 = vector.extract_strided_slice %2 {offsets = [0, 0, 0], sizes = [1, 4, 128], strides = [1, 1, 1]} : vector<4x4x128xf32> to vector<1x4x128xf32>
    %9 = vector.extract_strided_slice %3 {offsets = [0, 0, 0], sizes = [1, 4, 128], strides = [1, 1, 1]} : vector<4x4x128xf32> to vector<1x4x128xf32>
    %10 = arith.addf %6, %7 : vector<2x1x128xf32>
    %11 = vector.broadcast %8 : vector<1x4x128xf32> to vector<2x4x128xf32>
    %12 = vector.broadcast %10 : vector<2x1x128xf32> to vector<2x4x128xf32>
    %13 = arith.mulf %11, %12 : vector<2x4x128xf32>
    %14 = arith.addf %8, %9 : vector<1x4x128xf32>
    %15 = vector.broadcast %7 : vector<2x1x128xf32> to vector<2x4x128xf32>
    %16 = vector.broadcast %14 : vector<1x4x128xf32> to vector<2x4x128xf32>
    %17 = arith.mulf %15, %16 : vector<2x4x128xf32>
    %18 = arith.subf %13, %17 : vector<2x4x128xf32>
    %19 = arith.addf %4, %18 : vector<2x4x128xf32>
    %20 = arith.subf %9, %8 : vector<1x4x128xf32>
    %21 = vector.broadcast %6 : vector<2x1x128xf32> to vector<2x4x128xf32>
    %22 = vector.broadcast %20 : vector<1x4x128xf32> to vector<2x4x128xf32>
    %23 = arith.mulf %21, %22 : vector<2x4x128xf32>
    %24 = arith.addf %13, %23 : vector<2x4x128xf32>
    %25 = arith.addf %5, %24 : vector<2x4x128xf32>
    %26 = vector.extract_strided_slice %0 {offsets = [0, 1, 0], sizes = [2, 1, 128], strides = [1, 1, 1]} : vector<2x4x128xf32> to vector<2x1x128xf32>
    %27 = vector.extract_strided_slice %1 {offsets = [0, 1, 0], sizes = [2, 1, 128], strides = [1, 1, 1]} : vector<2x4x128xf32> to vector<2x1x128xf32>
    %28 = vector.extract_strided_slice %2 {offsets = [1, 0, 0], sizes = [1, 4, 128], strides = [1, 1, 1]} : vector<4x4x128xf32> to vector<1x4x128xf32>
    %29 = vector.extract_strided_slice %3 {offsets = [1, 0, 0], sizes = [1, 4, 128], strides = [1, 1, 1]} : vector<4x4x128xf32> to vector<1x4x128xf32>
    %30 = arith.addf %26, %27 : vector<2x1x128xf32>
    %31 = vector.broadcast %28 : vector<1x4x128xf32> to vector<2x4x128xf32>
    %32 = vector.broadcast %30 : vector<2x1x128xf32> to vector<2x4x128xf32>
    %33 = arith.mulf %31, %32 : vector<2x4x128xf32>
    %34 = arith.addf %28, %29 : vector<1x4x128xf32>
    %35 = vector.broadcast %27 : vector<2x1x128xf32> to vector<2x4x128xf32>
    %36 = vector.broadcast %34 : vector<1x4x128xf32> to vector<2x4x128xf32>
    %37 = arith.mulf %35, %36 : vector<2x4x128xf32>
    %38 = arith.subf %33, %37 : vector<2x4x128xf32>
    %39 = arith.addf %19, %38 : vector<2x4x128xf32>
    %40 = arith.subf %29, %28 : vector<1x4x128xf32>
    %41 = vector.broadcast %26 : vector<2x1x128xf32> to vector<2x4x128xf32>
    %42 = vector.broadcast %40 : vector<1x4x128xf32> to vector<2x4x128xf32>
    %43 = arith.mulf %41, %42 : vector<2x4x128xf32>
    %44 = arith.addf %33, %43 : vector<2x4x128xf32>
    %45 = arith.addf %25, %44 : vector<2x4x128xf32>
    %46 = vector.extract_strided_slice %0 {offsets = [0, 2, 0], sizes = [2, 1, 128], strides = [1, 1, 1]} : vector<2x4x128xf32> to vector<2x1x128xf32>
    %47 = vector.extract_strided_slice %1 {offsets = [0, 2, 0], sizes = [2, 1, 128], strides = [1, 1, 1]} : vector<2x4x128xf32> to vector<2x1x128xf32>
    %48 = vector.extract_strided_slice %2 {offsets = [2, 0, 0], sizes = [1, 4, 128], strides = [1, 1, 1]} : vector<4x4x128xf32> to vector<1x4x128xf32>
    %49 = vector.extract_strided_slice %3 {offsets = [2, 0, 0], sizes = [1, 4, 128], strides = [1, 1, 1]} : vector<4x4x128xf32> to vector<1x4x128xf32>
    %50 = arith.addf %46, %47 : vector<2x1x128xf32>
    %51 = vector.broadcast %48 : vector<1x4x128xf32> to vector<2x4x128xf32>
    %52 = vector.broadcast %50 : vector<2x1x128xf32> to vector<2x4x128xf32>
    %53 = arith.mulf %51, %52 : vector<2x4x128xf32>
    %54 = arith.addf %48, %49 : vector<1x4x128xf32>
    %55 = vector.broadcast %47 : vector<2x1x128xf32> to vector<2x4x128xf32>
    %56 = vector.broadcast %54 : vector<1x4x128xf32> to vector<2x4x128xf32>
    %57 = arith.mulf %55, %56 : vector<2x4x128xf32>
    %58 = arith.subf %53, %57 : vector<2x4x128xf32>
    %59 = arith.addf %39, %58 : vector<2x4x128xf32>
    %60 = arith.subf %49, %48 : vector<1x4x128xf32>
    %61 = vector.broadcast %46 : vector<2x1x128xf32> to vector<2x4x128xf32>
    %62 = vector.broadcast %60 : vector<1x4x128xf32> to vector<2x4x128xf32>
    %63 = arith.mulf %61, %62 : vector<2x4x128xf32>
    %64 = arith.addf %53, %63 : vector<2x4x128xf32>
    %65 = arith.addf %45, %64 : vector<2x4x128xf32>
    %66 = vector.extract_strided_slice %0 {offsets = [0, 3, 0], sizes = [2, 1, 128], strides = [1, 1, 1]} : vector<2x4x128xf32> to vector<2x1x128xf32>
    %67 = vector.extract_strided_slice %1 {offsets = [0, 3, 0], sizes = [2, 1, 128], strides = [1, 1, 1]} : vector<2x4x128xf32> to vector<2x1x128xf32>
    %68 = vector.extract_strided_slice %2 {offsets = [3, 0, 0], sizes = [1, 4, 128], strides = [1, 1, 1]} : vector<4x4x128xf32> to vector<1x4x128xf32>
    %69 = vector.extract_strided_slice %3 {offsets = [3, 0, 0], sizes = [1, 4, 128], strides = [1, 1, 1]} : vector<4x4x128xf32> to vector<1x4x128xf32>
    %70 = arith.addf %66, %67 : vector<2x1x128xf32>
    %71 = vector.broadcast %68 : vector<1x4x128xf32> to vector<2x4x128xf32>
    %72 = vector.broadcast %70 : vector<2x1x128xf32> to vector<2x4x128xf32>
    %73 = arith.mulf %71, %72 : vector<2x4x128xf32>
    %74 = arith.addf %68, %69 : vector<1x4x128xf32>
    %75 = vector.broadcast %67 : vector<2x1x128xf32> to vector<2x4x128xf32>
    %76 = vector.broadcast %74 : vector<1x4x128xf32> to vector<2x4x128xf32>
    %77 = arith.mulf %75, %76 : vector<2x4x128xf32>
    %78 = arith.subf %73, %77 : vector<2x4x128xf32>
    %79 = arith.addf %59, %78 : vector<2x4x128xf32>
    %80 = arith.subf %69, %68 : vector<1x4x128xf32>
    %81 = vector.broadcast %66 : vector<2x1x128xf32> to vector<2x4x128xf32>
    %82 = vector.broadcast %80 : vector<1x4x128xf32> to vector<2x4x128xf32>
    %83 = arith.mulf %81, %82 : vector<2x4x128xf32>
    %84 = arith.addf %73, %83 : vector<2x4x128xf32>
    %85 = arith.addf %65, %84 : vector<2x4x128xf32>
    %c0_12 = arith.constant 0 : index
    %c0_13 = arith.constant 0 : index
    %c0_14 = arith.constant 0 : index
    %86 = vector.load %arg5[%c0_12, %c0_13, %c0_14] : memref<2x4x128xf32, #tpu.memory_space<vmem>>, vector<2x4x128xf32>
    tpu.vector_store %arg5[%c0_12, %c0_13, %c0_14], %79 {strides = array<i32>} : memref<2x4x128xf32, #tpu.memory_space<vmem>>, vector<2x4x128xf32>,
    %c0_15 = arith.constant 0 : index
    %c0_16 = arith.constant 0 : index
    %c0_17 = arith.constant 0 : index
    %87 = vector.load %arg6[%c0_15, %c0_16, %c0_17] : memref<2x4x128xf32, #tpu.memory_space<vmem>>, vector<2x4x128xf32>
    tpu.vector_store %arg6[%c0_15, %c0_16, %c0_17], %85 {strides = array<i32>} : memref<2x4x128xf32, #tpu.memory_space<vmem>>, vector<2x4x128xf32>,
    return
  }
  func.func @transform_0(%arg0: i32) -> (i32, i32, i32) {
    %c0_i32 = arith.constant 0 : i32
    %c0_i32_0 = arith.constant 0 : i32
    %c0_i32_1 = arith.constant 0 : i32
    return %c0_i32, %c0_i32_0, %arg0 : i32, i32, i32
  }
  func.func @transform_1(%arg0: i32) -> (i32, i32, i32) {
    %c0_i32 = arith.constant 0 : i32
    %c0_i32_0 = arith.constant 0 : i32
    %c0_i32_1 = arith.constant 0 : i32
    return %c0_i32, %c0_i32_0, %arg0 : i32, i32, i32
  }
  func.func @transform_2(%arg0: i32) -> (i32, i32, i32) {
    %c0_i32 = arith.constant 0 : i32
    %c0_i32_0 = arith.constant 0 : i32
    %c0_i32_1 = arith.constant 0 : i32
    return %c0_i32, %c0_i32_0, %arg0 : i32, i32, i32
  }
  func.func @transform_3(%arg0: i32) -> (i32, i32, i32) {
    %c0_i32 = arith.constant 0 : i32
    %c0_i32_0 = arith.constant 0 : i32
    %c0_i32_1 = arith.constant 0 : i32
    return %c0_i32, %c0_i32_0, %arg0 : i32, i32, i32
  }
  func.func @transform_4(%arg0: i32) -> (i32, i32, i32) {
    %c0_i32 = arith.constant 0 : i32
    %c0_i32_0 = arith.constant 0 : i32
    %c0_i32_1 = arith.constant 0 : i32
    return %c0_i32, %c0_i32_0, %arg0 : i32, i32, i32
  }
  func.func @transform_5(%arg0: i32) -> (i32, i32, i32) {
    %c0_i32 = arith.constant 0 : i32
    %c0_i32_0 = arith.constant 0 : i32
    %c0_i32_1 = arith.constant 0 : i32
    return %c0_i32, %c0_i32_0, %arg0 : i32, i32, i32
  }
}

</mosaic_0001>

<llo_original>
// kernel: custom-call
$region0: #{custom-call}
  %s0 = inlined_call_operand.hbm [shape: c64[4,4,4,4], index: 0, kind: input, shape index: {}]
  %s1 = inlined_call_operand.vmem [shape: f32[4,4,4,4], index: 1, kind: output, shape index: {}]
  $region1: #{custom-call} parent=0
    #allocation0 [shape = 's32[1]{0}', space=sflag, size = 0x4, scoped, tag = 'scoped memory for custom-call']
    %2 = vsyncpa [#allocation0], 0
    %s4 = sshll.u32 %s0, 4
    %s5 = int_to_ptr.hbm [resolvable:$true] %s4
    %s6 = sshll.u32 %s1, 4
    %s7 = int_to_ptr.vmem [resolvable:$true] %s6
    %9 = dma.hbm_to_vmem [thread:$0]  %s5, 1024, %s7, [#allocation0]
    %11 = dma.done [#allocation0], 1024
    %12 = vsyncpa [#allocation0], 1

// kernel: custom-call.1
$region0: #{custom-call.1}
  %s0 = inlined_call_operand.hbm [shape: c64[4,4,4,4], index: 0, kind: input, shape index: {}]
  %s1 = inlined_call_operand.vmem [shape: f32[4,4,4,4], index: 1, kind: output, shape index: {}]
  %s2 = scalar_lea.hbm %s0, 64
  $region1: #{custom-call.1} parent=0
    #allocation0 [shape = 's32[1]{0}', space=sflag, size = 0x4, scoped, tag = 'scoped memory for custom-call.1']
    %3 = vsyncpa [#allocation0], 0
    %s5 = sshll.u32 %s2, 4
    %s6 = int_to_ptr.hbm [resolvable:$true] %s5
    %s7 = sshll.u32 %s1, 4
    %s8 = int_to_ptr.vmem [resolvable:$true] %s7
    %10 = dma.hbm_to_vmem [thread:$0]  %s6, 1024, %s8, [#allocation0]
    %12 = dma.done [#allocation0], 1024
    %13 = vsyncpa [#allocation0], 1

// kernel: _lambda_.1
$region0: #{_lambda_.1}
  #allocation0 [shape = 'u32[]', space=smem, size = 0x4, offset = 0x4, fixed_abs, tag = 'smem constant byte address 0x4 - core index']
  #allocation1 [shape = 'u32[72,128]{1,0:T(1,128)}', space=vmem, size = 0x9000, scoped, tag = 'internal scratch']
  %s0 = inlined_call_operand.vmem [shape: f32[2,4,128], index: 0, kind: input, shape index: {}]
  %s1 = inlined_call_operand.vmem [shape: f32[2,4,128], index: 1, kind: input, shape index: {}]
  %s2 = inlined_call_operand.vmem [shape: f32[4,4,128], index: 2, kind: input, shape index: {}]
  %s3 = inlined_call_operand.vmem [shape: f32[4,4,128], index: 3, kind: input, shape index: {}]
  %s4 = inlined_call_operand.vmem [shape: f32[2,4,128], index: 4, kind: output, shape index: {0}]
  %s5 = inlined_call_operand.vmem [shape: f32[2,4,128], index: 5, kind: output, shape index: {1}]
  %6 = xla_tuple %s4, %s5
  %s7 = sld [smem:[#allocation0]]
  $region34: #{_lambda_.1} parent=0
    _
  %s9 = ssub.s32 1, %s7
  %s10 = scalar_select 0, %s9, %s7
  // Predicated region
  $region2: #{_lambda_.1} parent=0 // pred_check
    _
  $region3: #{_lambda_.1} parent=0 // pred_check_branch
    %12 = sbr.rel (0) target = $region5
  $region4: #{_lambda_.1} parent=0 // pred_region
    _
  $region5: #{_lambda_.1} parent=0 // pred_fallthru
    _
  // Predicated region
  $region6: #{_lambda_.1} parent=0 // pred_check
    _
  $region7: #{_lambda_.1} parent=0 // pred_check_branch
    %14 = sbr.rel (0) target = $region9
  $region8: #{_lambda_.1} parent=0 // pred_region
    _
  $region9: #{_lambda_.1} parent=0 // pred_fallthru
    _
  // Predicated region
  $region10: #{_lambda_.1} parent=0 // pred_check
    _
  $region11: #{_lambda_.1} parent=0 // pred_check_branch
    %16 = sbr.rel (0) target = $region13
  $region12: #{_lambda_.1} parent=0 // pred_region
    _
  $region13: #{_lambda_.1} parent=0 // pred_fallthru
    _
  // Predicated region
  $region14: #{_lambda_.1} parent=0 // pred_check
    _
  $region15: #{_lambda_.1} parent=0 // pred_check_branch
    %18 = sbr.rel (0) target = $region17
  $region16: #{_lambda_.1} parent=0 // pred_region
    _
  $region17: #{_lambda_.1} parent=0 // pred_fallthru
    _
  %v19 = vld [vmem:[%s0] sm:$0xf]
  %v20 = vld [vmem:[%s0 + $0x4] sm:$0xf]
  %v21 = vld [vmem:[%s1] sm:$0xf]
  %v22 = vld [vmem:[%s1 + $0x4] sm:$0xf]
  %v23 = vld [vmem:[%s2] sm:$0xf]
  %v24 = vld [vmem:[%s2 + $0x4] sm:$0xf]
  %v25 = vld [vmem:[%s2 + $0x8] sm:$0xf]
  %v26 = vld [vmem:[%s2 + $0xc] sm:$0xf]
  %v27 = vld [vmem:[%s3] sm:$0xf]
  %v28 = vld [vmem:[%s3 + $0x4] sm:$0xf]
  %v29 = vld [vmem:[%s3 + $0x8] sm:$0xf]
  %v30 = vld [vmem:[%s3 + $0xc] sm:$0xf]
  %v31 = vadd.f32 %v19, %v21
  %v32 = vadd.f32 %v20, %v22
  %v33 = vperm.slane %v31, 0
  %v34 = vperm.slane %v32, 0
  %v35 = vmul.f32 %v23, %v33
  %v36 = vmul.f32 %v23, %v34
  %v37 = vadd.f32 %v23, %v27
  %v38 = vperm.slane %v21, 0
  %v39 = vperm.slane %v22, 0
  %v40 = vmul.f32 %v38, %v37
  %v41 = vmul.f32 %v39, %v37
  %v42 = vsub.f32 %v35, %v40
  %v43 = vsub.f32 %v36, %v41
  %v44 = vadd.f32 %v42, 0.0
  %v45 = vadd.f32 %v43, 0.0
  %v46 = vsub.f32 %v27, %v23
  %v47 = vperm.slane %v19, 0
  %v48 = vperm.slane %v20, 0
  %v49 = vmul.f32 %v47, %v46
  %v50 = vmul.f32 %v48, %v46
  %v51 = vadd.f32 %v35, %v49
  %v52 = vadd.f32 %v36, %v50
  %v53 = vadd.f32 %v51, 0.0
  %v54 = vadd.f32 %v52, 0.0
  %v55 = vperm.slane %v31, 1
  %v56 = vperm.slane %v32, 1
  %v57 = vmul.f32 %v24, %v55
  %v58 = vmul.f32 %v24, %v56
  %v59 = vadd.f32 %v24, %v28
  %v60 = vperm.slane %v21, 1
  %v61 = vperm.slane %v22, 1
  %v62 = vmul.f32 %v60, %v59
  %v63 = vmul.f32 %v61, %v59
  %v64 = vsub.f32 %v57, %v62
  %v65 = vsub.f32 %v58, %v63
  %v66 = vadd.f32 %v44, %v64
  %v67 = vadd.f32 %v45, %v65
  %v68 = vsub.f32 %v28, %v24
  %v69 = vperm.slane %v19, 1
  %v70 = vperm.slane %v20, 1
  %v71 = vmul.f32 %v69, %v68
  %v72 = vmul.f32 %v70, %v68
  %v73 = vadd.f32 %v57, %v71
  %v74 = vadd.f32 %v58, %v72
  %v75 = vadd.f32 %v53, %v73
  %v76 = vadd.f32 %v54, %v74
  %v77 = vperm.slane %v31, 2
  %v78 = vperm.slane %v32, 2
  %v79 = vmul.f32 %v25, %v77
  %v80 = vmul.f32 %v25, %v78
  %v81 = vadd.f32 %v25, %v29
  %v82 = vperm.slane %v21, 2
  %v83 = vperm.slane %v22, 2
  %v84 = vmul.f32 %v82, %v81
  %v85 = vmul.f32 %v83, %v81
  %v86 = vsub.f32 %v79, %v84
  %v87 = vsub.f32 %v80, %v85
  %v88 = vadd.f32 %v66, %v86
  %v89 = vadd.f32 %v67, %v87
  %v90 = vsub.f32 %v29, %v25
  %v91 = vperm.slane %v19, 2
  %v92 = vperm.slane %v20, 2
  %v93 = vmul.f32 %v91, %v90
  %v94 = vmul.f32 %v92, %v90
  %v95 = vadd.f32 %v79, %v93
  %v96 = vadd.f32 %v80, %v94
  %v97 = vadd.f32 %v75, %v95
  %v98 = vadd.f32 %v76, %v96
  %v99 = vperm.slane %v31, 3
  %v100 = vperm.slane %v32, 3
  %v101 = vmul.f32 %v26, %v99
  %v102 = vmul.f32 %v26, %v100
  %v103 = vadd.f32 %v26, %v30
  %v104 = vperm.slane %v21, 3
  %v105 = vperm.slane %v22, 3
  %v106 = vmul.f32 %v104, %v103
  %v107 = vmul.f32 %v105, %v103
  %v108 = vsub.f32 %v101, %v106
  %v109 = vsub.f32 %v102, %v107
  %v110 = vadd.f32 %v88, %v108
  %v111 = vadd.f32 %v89, %v109
  %v112 = vsub.f32 %v30, %v26
  %v113 = vperm.slane %v19, 3
  %v114 = vperm.slane %v20, 3
  %v115 = vmul.f32 %v113, %v112
  %v116 = vmul.f32 %v114, %v112
  %v117 = vadd.f32 %v101, %v115
  %v118 = vadd.f32 %v102, %v116
  %v119 = vadd.f32 %v97, %v117
  %v120 = vadd.f32 %v98, %v118
  %121 = vst [vmem:[%s4] sm:$0xf] %v110
  %122 = vst [vmem:[%s4 + $0x4] sm:$0xf] %v111
  %123 = vst [vmem:[%s5] sm:$0xf] %v119
  %124 = vst [vmem:[%s5 + $0x4] sm:$0xf] %v120
  // Predicated region
  $region18: #{_lambda_.1} parent=0 // pred_check
    _
  $region19: #{_lambda_.1} parent=0 // pred_check_branch
    %126 = sbr.rel (0) target = $region21
  $region20: #{_lambda_.1} parent=0 // pred_region
    _
  $region21: #{_lambda_.1} parent=0 // pred_fallthru
    _
  // Predicated region
  $region22: #{_lambda_.1} parent=0 // pred_check
    _
  $region23: #{_lambda_.1} parent=0 // pred_check_branch
    %128 = sbr.rel (0) target = $region25
  $region24: #{_lambda_.1} parent=0 // pred_region
    _
  $region25: #{_lambda_.1} parent=0 // pred_fallthru
    _
  // Predicated region
  $region26: #{_lambda_.1} parent=0 // pred_check
    _
  $region27: #{_lambda_.1} parent=0 // pred_check_branch
    %130 = sbr.rel (0) target = $region29
  $region28: #{_lambda_.1} parent=0 // pred_region
    _
  $region29: #{_lambda_.1} parent=0 // pred_fallthru
    _
  // Predicated region
  $region30: #{_lambda_.1} parent=0 // pred_check
    _
  $region31: #{_lambda_.1} parent=0 // pred_check_branch
    %132 = sbr.rel (0) target = $region33
  $region32: #{_lambda_.1} parent=0 // pred_region
    _
  $region33: #{_lambda_.1} parent=0 // pred_fallthru
    _

// kernel: reverse.0
$region0: #{reverse.0}
  %s0 = inlined_call_operand.vmem [shape: f32[2,4,16,7], index: 0, kind: input, shape index: {}]
  %s1 = inlined_call_operand.vmem [shape: f32[2,4,16,7], index: 1, kind: output, shape index: {}]
  $region1: #{reverse.0} parent=0
    #allocation0 [shape = 'u8[65536]{0}', space=vmem, size = 0x10000, scoped, tag = 'operand span for operand 0']
    #allocation1 [shape = 'u8[32768]{0}', space=vmem, size = 0x8000, scoped, tag = 'operand span for operand 1']
    %s2 = scalar_lea.vmem [#allocation0], 8
    // Predicated region
    $region2: #{reverse.0} parent=1 // pred_check
      _
    $region3: #{reverse.0} parent=1 // pred_check_branch
      %4 = sbr.rel (0) target = $region5
    $region4: #{reverse.0} parent=1 // pred_region
      // Predicated region
      $region6: #{reverse.0} parent=4 // pred_check
        _
      $region7: #{reverse.0} parent=4 // pred_check_branch
        %6 = sbr.rel (0) target = $region9
      $region8: #{reverse.0} parent=4 // pred_region
        // Predicated region
        $region21: #{reverse.0} parent=8 // pred_check
          _
        $region22: #{reverse.0} parent=8 // pred_check_branch
          %36 = sbr.rel (0) target = $region24
        $region23: #{reverse.0} parent=8 // pred_region
          loop: start=0, step=1, limit=1
          $region25: #{reverse.0} parent=23 // loop_pre_header
            _
          $region26: #{reverse.0} parent=23 // loop_header
            %s38 = sphi 0, %s42
            %p39 = scmp.ge.s32.totalorder %s38, 1
            %s43 = sphi %s0, %s0
            %s44 = sphi %s2, %s2
          $region27: #{reverse.0} parent=23 // loop_header_branch
            %41 = sbr.rel (%p39) target = $region31
          $region28: #{reverse.0} parent=23 // loop_body
            %v45 = vld [vmem:[%s43] sm:$0xff]
            %46 = vst [vmem:[%s44] sm:$0xff] %v45
            %v47 = vld [vmem:[%s43 + $0x8] sm:$0xff]
            %48 = vst [vmem:[%s44 + $0x10] sm:$0xff] %v47
            %v49 = vld [vmem:[%s43 + $0x10] sm:$0xff]
            %50 = vst [vmem:[%s44 + $0x20] sm:$0xff] %v49
            %v51 = vld [vmem:[%s43 + $0x18] sm:$0xff]
            %52 = vst [vmem:[%s44 + $0x30] sm:$0xff] %v51
            %v53 = vld [vmem:[%s43 + $0x20] sm:$0xff]
            %54 = vst [vmem:[%s44 + $0x40] sm:$0xff] %v53
            %v55 = vld [vmem:[%s43 + $0x28] sm:$0xff]
            %56 = vst [vmem:[%s44 + $0x50] sm:$0xff] %v55
            %v57 = vld [vmem:[%s43 + $0x30] sm:$0xff]
            %58 = vst [vmem:[%s44 + $0x60] sm:$0xff] %v57
            %v59 = vld [vmem:[%s43 + $0x38] sm:$0xff]
            %60 = vst [vmem:[%s44 + $0x70] sm:$0xff] %v59
          $region29: #{reverse.0} parent=23 // loop_footer
            %s42 = sadd.s32 1, %s38
          $region30: #{reverse.0} parent=23 // loop_footer_branch
            %37 = sbr.rel target = $region26
          $region31: #{reverse.0} parent=23 // loop_exit
            _
        $region24: #{reverse.0} parent=8 // pred_fallthru
          _
        // Predicated region
        $region32: #{reverse.0} parent=8 // pred_check
          _
        $region33: #{reverse.0} parent=8 // pred_check_branch
          %62 = sbr.rel target = $region35
        $region34: #{reverse.0} parent=8 // pred_region
          _
        $region35: #{reverse.0} parent=8 // pred_fallthru
          _
      $region9: #{reverse.0} parent=4 // pred_fallthru
        _
      // Predicated region
      $region10: #{reverse.0} parent=4 // pred_check
        _
      $region11: #{reverse.0} parent=4 // pred_check_branch
        %8 = sbr.rel target = $region13
      $region12: #{reverse.0} parent=4 // pred_region
        %s10 = ssub.s32 256, 1
        loop: start=0, step=1, limit=1
        $region14: #{reverse.0} parent=12 // loop_pre_header
          _
        $region15: #{reverse.0} parent=12 // loop_header
          %s12 = sphi 0, %s16
          %p13 = scmp.ge.s32.totalorder %s12, 1
          %s17 = sphi %s0, %s0
          %s18 = sphi %s2, %s2
        $region16: #{reverse.0} parent=12 // loop_header_branch
          %15 = sbr.rel (%p13) target = $region20
        $region17: #{reverse.0} parent=12 // loop_body
          %v19 = vld [vmem:[%s17] sm:%s10]
          %20 = vst [vmem:[%s18] sm:%s10] %v19
          %v21 = vld [vmem:[%s17 + $0x8] sm:%s10]
          %22 = vst [vmem:[%s18 + $0x10] sm:%s10] %v21
          %v23 = vld [vmem:[%s17 + $0x10] sm:%s10]
          %24 = vst [vmem:[%s18 + $0x20] sm:%s10] %v23
          %v25 = vld [vmem:[%s17 + $0x18] sm:%s10]
          %26 = vst [vmem:[%s18 + $0x30] sm:%s10] %v25
          %v27 = vld [vmem:[%s17 + $0x20] sm:%s10]
          %28 = vst [vmem:[%s18 + $0x40] sm:%s10] %v27
          %v29 = vld [vmem:[%s17 + $0x28] sm:%s10]
          %30 = vst [vmem:[%s18 + $0x50] sm:%s10] %v29
          %v31 = vld [vmem:[%s17 + $0x30] sm:%s10]
          %32 = vst [vmem:[%s18 + $0x60] sm:%s10] %v31
          %v33 = vld [vmem:[%s17 + $0x38] sm:%s10]
          %34 = vst [vmem:[%s18 + $0x70] sm:%s10] %v33
        $region18: #{reverse.0} parent=12 // loop_footer
          %s16 = sadd.s32 1, %s12
        $region19: #{reverse.0} parent=12 // loop_footer_branch
          %11 = sbr.rel target = $region15
        $region20: #{reverse.0} parent=12 // loop_exit
          _
      $region13: #{reverse.0} parent=4 // pred_fallthru
        _
    $region5: #{reverse.0} parent=1 // pred_fallthru
      _
    %63 = vnop
    %s64 = scalar_lea.vmem [#allocation0], 7
    %v65 = vld [vmem:[%s64] ss:$-1 sm:$0xff]
    %v66 = vrot.slane %v65, 1
    %67 = vst [vmem:[#allocation1] sm:$0xff] %v66
    %s68 = scalar_lea.vmem [#allocation0], 8
    %s69 = scalar_lea.vmem %s68, 7 [#allocation0]
    %v70 = vld [vmem:[%s69] ss:$-1 sm:$0xff]
    %v71 = vrot.slane %v70, 1
    %v72 = vlaneseq
    %v73 = vshrl.u32 %v72, 7
    %vm74 = vcmp.lt.s32.totalorder %v73, 7
    %75 = vst.msk [vmem:[#allocation1] sm:$0xff] %vm74, %v71
    %s76 = scalar_lea.vmem [#allocation1], 8
    %s77 = scalar_lea.vmem [#allocation0], 16
    %s78 = scalar_lea.vmem %s77, 7 [#allocation0]
    %v79 = vld [vmem:[%s78] ss:$-1 sm:$0xff]
    %v80 = vrot.slane %v79, 1
    %81 = vst [vmem:[%s76] sm:$0xff] %v80
    %s82 = scalar_lea.vmem %s77, 8 [#allocation0]
    %s83 = scalar_lea.vmem %s82, 7 [#allocation0]
    %v84 = vld [vmem:[%s83] ss:$-1 sm:$0xff]
    %v85 = vrot.slane %v84, 1
    %v86 = vlaneseq
    %v87 = vshrl.u32 %v86, 7
    %vm88 = vcmp.lt.s32.totalorder %v87, 7
    %89 = vst.msk [vmem:[%s76] sm:$0xff] %vm88, %v85
    %s90 = scalar_lea.vmem [#allocation1], 16
    %s91 = scalar_lea.vmem [#allocation0], 32
    %s92 = scalar_lea.vmem %s91, 7 [#allocation0]
    %v93 = vld [vmem:[%s92] ss:$-1 sm:$0xff]
    %v94 = vrot.slane %v93, 1
    %95 = vst [vmem:[%s90] sm:$0xff] %v94
    %s96 = scalar_lea.vmem %s91, 8 [#allocation0]
    %s97 = scalar_lea.vmem %s96, 7 [#allocation0]
    %v98 = vld [vmem:[%s97] ss:$-1 sm:$0xff]
    %v99 = vrot.slane %v98, 1
    %v100 = vlaneseq
    %v101 = vshrl.u32 %v100, 7
    %vm102 = vcmp.lt.s32.totalorder %v101, 7
    %103 = vst.msk [vmem:[%s90] sm:$0xff] %vm102, %v99
    %s104 = scalar_lea.vmem [#allocation1], 24
    %s105 = scalar_lea.vmem [#allocation0], 48
    %s106 = scalar_lea.vmem %s105, 7 [#allocation0]
    %v107 = vld [vmem:[%s106] ss:$-1 sm:$0xff]
    %v108 = vrot.slane %v107, 1
    %109 = vst [vmem:[%s104] sm:$0xff] %v108
    %s110 = scalar_lea.vmem %s105, 8 [#allocation0]
    %s111 = scalar_lea.vmem %s110, 7 [#allocation0]
    %v112 = vld [vmem:[%s111] ss:$-1 sm:$0xff]
    %v113 = vrot.slane %v112, 1
    %v114 = vlaneseq
    %v115 = vshrl.u32 %v114, 7
    %vm116 = vcmp.lt.s32.totalorder %v115, 7
    %117 = vst.msk [vmem:[%s104] sm:$0xff] %vm116, %v113
    %s118 = scalar_lea.vmem [#allocation1], 32
    %s119 = scalar_lea.vmem [#allocation0], 64
    %s120 = scalar_lea.vmem %s119, 7 [#allocation0]
    %v121 = vld [vmem:[%s120] ss:$-1 sm:$0xff]
    %v122 = vrot.slane %v121, 1
    %123 = vst [vmem:[%s118] sm:$0xff] %v122
    %s124 = scalar_lea.vmem %s119, 8 [#allocation0]
    %s125 = scalar_lea.vmem %s124, 7 [#allocation0]
    %v126 = vld [vmem:[%s125] ss:$-1 sm:$0xff]
    %v127 = vrot.slane %v126, 1
    %v128 = vlaneseq
    %v129 = vshrl.u32 %v128, 7
    %vm130 = vcmp.lt.s32.totalorder %v129, 7
    %131 = vst.msk [vmem:[%s118] sm:$0xff] %vm130, %v127
    %s132 = scalar_lea.vmem [#allocation1], 40
    %s133 = scalar_lea.vmem [#allocation0], 80
    %s134 = scalar_lea.vmem %s133, 7 [#allocation0]
    %v135 = vld [vmem:[%s134] ss:$-1 sm:$0xff]
    %v136 = vrot.slane %v135, 1
    %137 = vst [vmem:[%s132] sm:$0xff] %v136
    %s138 = scalar_lea.vmem %s133, 8 [#allocation0]
    %s139 = scalar_lea.vmem %s138, 7 [#allocation0]
    %v140 = vld [vmem:[%s139] ss:$-1 sm:$0xff]
    %v141 = vrot.slane %v140, 1
    %v142 = vlaneseq
    %v143 = vshrl.u32 %v142, 7
    %vm144 = vcmp.lt.s32.totalorder %v143, 7
    %145 = vst.msk [vmem:[%s132] sm:$0xff] %vm144, %v141
    %s146 = scalar_lea.vmem [#allocation1], 48
    %s147 = scalar_lea.vmem [#allocation0], 96
    %s148 = scalar_lea.vmem %s147, 7 [#allocation0]
    %v149 = vld [vmem:[%s148] ss:$-1 sm:$0xff]
    %v150 = vrot.slane %v149, 1
    %151 = vst [vmem:[%s146] sm:$0xff] %v150
    %s152 = scalar_lea.vmem %s147, 8 [#allocation0]
    %s153 = scalar_lea.vmem %s152, 7 [#allocation0]
    %v154 = vld [vmem:[%s153] ss:$-1 sm:$0xff]
    %v155 = vrot.slane %v154, 1
    %v156 = vlaneseq
    %v157 = vshrl.u32 %v156, 7
    %vm158 = vcmp.lt.s32.totalorder %v157, 7
    %159 = vst.msk [vmem:[%s146] sm:$0xff] %vm158, %v155
    %s160 = scalar_lea.vmem [#allocation1], 56
    %s161 = scalar_lea.vmem [#allocation0], 112
    %s162 = scalar_lea.vmem %s161, 7 [#allocation0]
    %v163 = vld [vmem:[%s162] ss:$-1 sm:$0xff]
    %v164 = vrot.slane %v163, 1
    %165 = vst [vmem:[%s160] sm:$0xff] %v164
    %s166 = scalar_lea.vmem %s161, 8 [#allocation0]
    %s167 = scalar_lea.vmem %s166, 7 [#allocation0]
    %v168 = vld [vmem:[%s167] ss:$-1 sm:$0xff]
    %v169 = vrot.slane %v168, 1
    %v170 = vlaneseq
    %v171 = vshrl.u32 %v170, 7
    %vm172 = vcmp.lt.s32.totalorder %v171, 7
    %173 = vst.msk [vmem:[%s160] sm:$0xff] %vm172, %v169
    // Predicated region
    $region36: #{reverse.0} parent=1 // pred_check
      _
    $region37: #{reverse.0} parent=1 // pred_check_branch
      %175 = sbr.rel (0) target = $region39
    $region38: #{reverse.0} parent=1 // pred_region
      // Predicated region
      $region40: #{reverse.0} parent=38 // pred_check
        _
      $region41: #{reverse.0} parent=38 // pred_check_branch
        %177 = sbr.rel (0) target = $region43
      $region42: #{reverse.0} parent=38 // pred_region
        // Predicated region
        $region55: #{reverse.0} parent=42 // pred_check
          _
        $region56: #{reverse.0} parent=42 // pred_check_branch
          %207 = sbr.rel (0) target = $region58
        $region57: #{reverse.0} parent=42 // pred_region
          loop: start=0, step=1, limit=1
          $region59: #{reverse.0} parent=57 // loop_pre_header
            _
          $region60: #{reverse.0} parent=57 // loop_header
            %s209 = sphi 0, %s213
            %p210 = scmp.ge.s32.totalorder %s209, 1
            %s214 = sphi [#allocation1], [#allocation1]
            %s215 = sphi %s1, %s1
          $region61: #{reverse.0} parent=57 // loop_header_branch
            %212 = sbr.rel (%p210) target = $region65
          $region62: #{reverse.0} parent=57 // loop_body
            %v216 = vld [vmem:[%s214] sm:$0xff]
            %217 = vst [vmem:[%s215] sm:$0xff] %v216
            %v218 = vld [vmem:[%s214 + $0x8] sm:$0xff]
            %219 = vst [vmem:[%s215 + $0x8] sm:$0xff] %v218
            %v220 = vld [vmem:[%s214 + $0x10] sm:$0xff]
            %221 = vst [vmem:[%s215 + $0x10] sm:$0xff] %v220
            %v222 = vld [vmem:[%s214 + $0x18] sm:$0xff]
            %223 = vst [vmem:[%s215 + $0x18] sm:$0xff] %v222
            %v224 = vld [vmem:[%s214 + $0x20] sm:$0xff]
            %225 = vst [vmem:[%s215 + $0x20] sm:$0xff] %v224
            %v226 = vld [vmem:[%s214 + $0x28] sm:$0xff]
            %227 = vst [vmem:[%s215 + $0x28] sm:$0xff] %v226
            %v228 = vld [vmem:[%s214 + $0x30] sm:$0xff]
            %229 = vst [vmem:[%s215 + $0x30] sm:$0xff] %v228
            %v230 = vld [vmem:[%s214 + $0x38] sm:$0xff]
            %231 = vst [vmem:[%s215 + $0x38] sm:$0xff] %v230
          $region63: #{reverse.0} parent=57 // loop_footer
            %s213 = sadd.s32 1, %s209
          $region64: #{reverse.0} parent=57 // loop_footer_branch
            %208 = sbr.rel target = $region60
          $region65: #{reverse.0} parent=57 // loop_exit
            _
        $region58: #{reverse.0} parent=42 // pred_fallthru
          _
        // Predicated region
        $region66: #{reverse.0} parent=42 // pred_check
          _
        $region67: #{reverse.0} parent=42 // pred_check_branch
          %233 = sbr.rel target = $region69
        $region68: #{reverse.0} parent=42 // pred_region
          _
        $region69: #{reverse.0} parent=42 // pred_fallthru
          _
      $region43: #{reverse.0} parent=38 // pred_fallthru
        _
      // Predicated region
      $region44: #{reverse.0} parent=38 // pred_check
        _
      $region45: #{reverse.0} parent=38 // pred_check_branch
        %179 = sbr.rel target = $region47
      $region46: #{reverse.0} parent=38 // pred_region
        %s181 = ssub.s32 256, 1
        loop: start=0, step=1, limit=1
        $region48: #{reverse.0} parent=46 // loop_pre_header
          _
        $region49: #{reverse.0} parent=46 // loop_header
          %s183 = sphi 0, %s187
          %p184 = scmp.ge.s32.totalorder %s183, 1
          %s188 = sphi [#allocation1], [#allocation1]
          %s189 = sphi %s1, %s1
        $region50: #{reverse.0} parent=46 // loop_header_branch
          %186 = sbr.rel (%p184) target = $region54
        $region51: #{reverse.0} parent=46 // loop_body
          %v190 = vld [vmem:[%s188] sm:%s181]
          %191 = vst [vmem:[%s189] sm:%s181] %v190
          %v192 = vld [vmem:[%s188 + $0x8] sm:%s181]
          %193 = vst [vmem:[%s189 + $0x8] sm:%s181] %v192
          %v194 = vld [vmem:[%s188 + $0x10] sm:%s181]
          %195 = vst [vmem:[%s189 + $0x10] sm:%s181] %v194
          %v196 = vld [vmem:[%s188 + $0x18] sm:%s181]
          %197 = vst [vmem:[%s189 + $0x18] sm:%s181] %v196
          %v198 = vld [vmem:[%s188 + $0x20] sm:%s181]
          %199 = vst [vmem:[%s189 + $0x20] sm:%s181] %v198
          %v200 = vld [vmem:[%s188 + $0x28] sm:%s181]
          %201 = vst [vmem:[%s189 + $0x28] sm:%s181] %v200
          %v202 = vld [vmem:[%s188 + $0x30] sm:%s181]
          %203 = vst [vmem:[%s189 + $0x30] sm:%s181] %v202
          %v204 = vld [vmem:[%s188 + $0x38] sm:%s181]
          %205 = vst [vmem:[%s189 + $0x38] sm:%s181] %v204
        $region52: #{reverse.0} parent=46 // loop_footer
          %s187 = sadd.s32 1, %s183
        $region53: #{reverse.0} parent=46 // loop_footer_branch
          %182 = sbr.rel target = $region49
        $region54: #{reverse.0} parent=46 // loop_exit
          _
      $region47: #{reverse.0} parent=38 // pred_fallthru
        _
    $region39: #{reverse.0} parent=1 // pred_fallthru
      _
    %234 = vnop

</llo_original>
